<compile_context>
chip_gen: v5e
topology: v5e:2x2
jax: 0.10.0
libtpu: 0.0.40
codegen_flags: <defaults>
</compile_context>

<pallas_src>
import functools

import jax
import jax.numpy as jnp
import numpy as np
from jax.experimental import pallas as pl
from jax.experimental.pallas import tpu as pltpu

IN_FEATURES = 28 * 28   # 784
OUT_FEATURES = 10
TB_MAX = 4096           # max batch-tile rows (f32 tiles; safe on v5e/v6e/v7x)


def svm_linear_kernel(x_ref, w_ref, b_ref, o_ref):
    # x tile: (TB, 784) f32, w: (784, 10) f32, b: (1, 10) f32.
    # MXU matmul with f32 accumulation + bias add on the VPU.
    acc = jnp.dot(x_ref[...], w_ref[...], preferred_element_type=jnp.float32)
    o_ref[...] = (acc + b_ref[...]).astype(o_ref.dtype)


def prepare_params(weight, bias):
    """One-time parameter prep (hoisted out of the per-call path).

    weight : (10, 784) f32  (PyTorch nn.Linear layout)
    bias   : (10,)     f32
    returns: w_t (784, 10) f32, b2d (1, 10) f32
    """
    w_t = jnp.asarray(weight, jnp.float32).T                         # (784, 10)
    b2d = jnp.asarray(bias, jnp.float32).reshape(1, OUT_FEATURES)    # (1, 10)
    return w_t, b2d


def _round_up(x, m):
    return ((x + m - 1) // m) * m


def _choose_tb(B):
    """Batch-tile rows: multiple of 8 (or == B), >= 2 grid steps when B > 8."""
    if B <= 8:
        return B                       # block == full batch dim (always legal)
    tb = _round_up(pl.cdiv(B, 2), 8)   # >= 2 tiles -> both v7x TCs get work
    return min(TB_MAX, tb)


@functools.partial(jax.jit, static_argnames=())
def svm_forward(x_nchw, w_t, b2d):
    """Forward pass of SVMModel.

    x_nchw : (B, 1, 28, 28) float32 (NCHW, like the PyTorch module input)
    w_t    : (784, 10) f32  (pre-transposed weight from prepare_params)
    b2d    : (1, 10)   f32
    returns: (B, 10)   f32
    """
    B = x_nchw.shape[0]
    # nn.Flatten() equivalent -- a contiguous reshape, free in XLA.
    x_flat = x_nchw.reshape(B, IN_FEATURES)

    TB = _choose_tb(B)
    grid = (pl.cdiv(B, TB),)            # Pallas masks the partial last tile

    cost = pl.CostEstimate(
        flops=2 * B * IN_FEATURES * OUT_FEATURES,
        transcendentals=0,
        bytes_accessed=(B * IN_FEATURES * 4               # x (f32)
                        + IN_FEATURES * OUT_FEATURES * 4  # w (f32)
                        + OUT_FEATURES * 4                # bias
                        + B * OUT_FEATURES * 4),          # out (f32)
    )

    out = pl.pallas_call(
        svm_linear_kernel,
        out_shape=jax.ShapeDtypeStruct((B, OUT_FEATURES), jnp.float32),
        grid_spec=pltpu.PrefetchScalarGridSpec(
            num_scalar_prefetch=0,
            grid=grid,
            in_specs=[
                # x: streamed tile-by-tile over the batch axis.
                pl.BlockSpec((TB, IN_FEATURES), lambda i: (i, 0)),
                # weight / bias: constant index_map -> stay VMEM-resident.
                pl.BlockSpec((IN_FEATURES, OUT_FEATURES), lambda i: (0, 0)),
                pl.BlockSpec((1, OUT_FEATURES), lambda i: (0, 0)),
            ],
            out_specs=pl.BlockSpec((TB, OUT_FEATURES), lambda i: (i, 0)),
        ),
        compiler_params=pltpu.CompilerParams(
            # Batch tiles are independent -> parallel (2 TCs on v7x).
            dimension_semantics=("parallel",),
            # ~30 MiB needed at TB=4096 (double-buffered f32 x + output +
            # weight); 48 MiB is safe on v7x's 64 MiB physical VMEM and is
            # required explicitly on v5e (16 MiB default scoped limit).
            vmem_limit_bytes=48 * 1024 * 1024,
        ),
        cost_estimate=cost,
    )(x_flat, w_t, b2d)

    return out


if __name__ == "__main__":
    key = jax.random.PRNGKey(0)
    k_x, k_w, k_b = jax.random.split(key, 3)

    B = 2
    # Deterministic synthetic parameters, matching nn.Linear(784, 10) init
    # convention (uniform in +/- 1/sqrt(fan_in)).
    bound = 1.0 / jnp.sqrt(jnp.float32(IN_FEATURES))
    weight = jax.random.uniform(k_w, (OUT_FEATURES, IN_FEATURES), jnp.float32,
                                -bound, bound)
    bias = jax.random.uniform(k_b, (OUT_FEATURES,), jnp.float32, -bound, bound)

    # Example input, NCHW like an MNIST batch.
    x = jax.random.normal(k_x, (B, 1, 28, 28), jnp.float32)

    w_t, b2d = prepare_params(weight, bias)   # one-time prep, not per-call
    out = svm_forward(x, w_t, b2d)
    out = jax.block_until_ready(out)
    assert out.shape == (B, OUT_FEATURES)

    # Reference: PyTorch-equivalent math in float64 on host (covers any
    # MXU f32-path rounding; f32 inputs => no bf16 input-rounding error now).
    x_np = np.asarray(x, np.float64).reshape(B, IN_FEATURES)
    w_np = np.asarray(weight, np.float64)
    b_np = np.asarray(bias, np.float64)
    ref = (x_np @ w_np.T + b_np).astype(np.float32)
    assert jnp.allclose(out, ref, atol=1e-2, rtol=1e-2), (
        jnp.max(jnp.abs(out - ref)))

    print("KERNEL_OK")
</pallas_src>

<mosaic_0001>
module attributes {stable_mosaic.version = 11 : i64} {
  func.func @svm_linear_kernel(%arg0: i32, %arg1: memref<2x784xf32, #tpu.memory_space<vmem>>, %arg2: memref<784x10xf32, #tpu.memory_space<vmem>>, %arg3: memref<1x10xf32, #tpu.memory_space<vmem>>, %arg4: memref<2x10xf32, #tpu.memory_space<vmem>>) attributes {dimension_semantics = [#tpu.dimension_semantics<parallel>], iteration_bounds = array<i64: 1>, scalar_prefetch = 0 : i64, scratch_operands = 0 : i64, tpu.core_type = #tpu.core_type<tc>, window_params = [{transform_indices = @transform_0, window_bounds = array<i64: 2, 784>}, {pipeline_mode = #tpu.pipeline_mode<synchronous>, transform_indices = @transform_1, window_bounds = array<i64: 784, 10>}, {pipeline_mode = #tpu.pipeline_mode<synchronous>, transform_indices = @transform_2, window_bounds = array<i64: 1, 10>}, {transform_indices = @transform_3, window_bounds = array<i64: 2, 10>}]} {
    %c0 = arith.constant 0 : index
    %c0_0 = arith.constant 0 : index
    %0 = vector.load %arg1[%c0, %c0_0] : memref<2x784xf32, #tpu.memory_space<vmem>>, vector<2x784xf32>
    %c0_1 = arith.constant 0 : index
    %c0_2 = arith.constant 0 : index
    %1 = vector.load %arg2[%c0_1, %c0_2] : memref<784x10xf32, #tpu.memory_space<vmem>>, vector<784x10xf32>
    %cst = arith.constant dense<0.000000e+00> : vector<2x10xf32>
    %2 = tpu.matmul %0, %1, %cst {dimension_numbers = #tpu.dot_dimension_numbers<[1], [0], [0], [1], [0, 0, 1, 1], [], []>} : vector<2x784xf32>, vector<784x10xf32>, vector<2x10xf32> -> vector<2x10xf32>
    %c0_3 = arith.constant 0 : index
    %c0_4 = arith.constant 0 : index
    %3 = vector.load %arg3[%c0_3, %c0_4] : memref<1x10xf32, #tpu.memory_space<vmem>>, vector<1x10xf32>
    %4 = vector.broadcast %3 : vector<1x10xf32> to vector<2x10xf32>
    %5 = arith.addf %2, %4 : vector<2x10xf32>
    %c0_5 = arith.constant 0 : index
    %c0_6 = arith.constant 0 : index
    %6 = vector.load %arg4[%c0_5, %c0_6] : memref<2x10xf32, #tpu.memory_space<vmem>>, vector<2x10xf32>
    tpu.vector_store %arg4[%c0_5, %c0_6], %5 {strides = array<i32>} : memref<2x10xf32, #tpu.memory_space<vmem>>, vector<2x10xf32>,
    return
  }
  func.func @transform_0(%arg0: i32) -> (i32, i32) {
    %c0_i32 = arith.constant 0 : i32
    %c0_i32_0 = arith.constant 0 : i32
    return %arg0, %c0_i32 : i32, i32
  }
  func.func @transform_1(%arg0: i32) -> (i32, i32) {
    %c0_i32 = arith.constant 0 : i32
    %c0_i32_0 = arith.constant 0 : i32
    %c0_i32_1 = arith.constant 0 : i32
    return %c0_i32, %c0_i32_0 : i32, i32
  }
  func.func @transform_2(%arg0: i32) -> (i32, i32) {
    %c0_i32 = arith.constant 0 : i32
    %c0_i32_0 = arith.constant 0 : i32
    %c0_i32_1 = arith.constant 0 : i32
    return %c0_i32, %c0_i32_0 : i32, i32
  }
  func.func @transform_3(%arg0: i32) -> (i32, i32) {
    %c0_i32 = arith.constant 0 : i32
    %c0_i32_0 = arith.constant 0 : i32
    return %arg0, %c0_i32 : i32, i32
  }
}

</mosaic_0001>

<llo_original>
// kernel: svm_forward.1
$region0: #{svm_forward.1}
  #allocation0 [shape = 'u32[]', space=smem, size = 0x4, offset = 0x4, fixed_abs, tag = 'smem constant byte address 0x4 - core index']
  #allocation1 [shape = 'u32[72,128]{1,0:T(1,128)}', space=vmem, size = 0x9000, scoped, tag = 'internal scratch']
  %s0 = inlined_call_operand.vmem [shape: f32[2,784], index: 0, kind: input, shape index: {}]
  %s1 = inlined_call_operand.vmem [shape: f32[784,10], index: 1, kind: input, shape index: {}]
  %s2 = inlined_call_operand.vmem [shape: f32[1,10], index: 2, kind: input, shape index: {}]
  %s3 = inlined_call_operand.hbm [shape: f32[2,10], index: 3, kind: output, shape index: {}]
  %s4 = sld [smem:[#allocation0]]
  $region22: #{svm_forward.1} parent=0
    _
  %s6 = ssub.s32 1, %s4
  %s7 = scalar_select 0, %s6, %s4
  $region1: #{svm_forward.1} parent=0
    #allocation2 [shape = 'u8[1024]{0}', space=vmem, size = 0x400, scoped, tag = 'output window, operand 0, single buffered']
    #allocation3 [shape = 's32[1]{0}', space=sflag, size = 0x4, scoped, tag = 'scoped memory for svm_forward.1']
    %8 = vsyncpa [#allocation3], 0
    // Predicated region
    $region2: #{svm_forward.1} parent=1 // pred_check
      _
    $region3: #{svm_forward.1} parent=1 // pred_check_branch
      %10 = sbr.rel (0) target = $region5
    $region4: #{svm_forward.1} parent=1 // pred_region
      _
    $region5: #{svm_forward.1} parent=1 // pred_fallthru
      _
    // Predicated region
    $region6: #{svm_forward.1} parent=1 // pred_check
      _
    $region7: #{svm_forward.1} parent=1 // pred_check_branch
      %12 = sbr.rel (0) target = $region9
    $region8: #{svm_forward.1} parent=1 // pred_region
      _
    $region9: #{svm_forward.1} parent=1 // pred_fallthru
      _
    // Predicated region
    $region10: #{svm_forward.1} parent=1 // pred_check
      _
    $region11: #{svm_forward.1} parent=1 // pred_check_branch
      %14 = sbr.rel (0) target = $region13
    $region12: #{svm_forward.1} parent=1 // pred_region
      _
    $region13: #{svm_forward.1} parent=1 // pred_fallthru
      _
    %v15 = vld [vmem:[%s0] sm:$0xff]
    %v16 = vld [vmem:[%s0 + $0x8] sm:$0x3f]
    %v17 = vld [vmem:[%s1] sm:$0xff]
    %v18 = vld [vmem:[%s1 + $0x8] sm:$0xff]
    %v19 = vld [vmem:[%s1 + $0x10] sm:$0xff]
    %v20 = vld [vmem:[%s1 + $0x18] sm:$0xff]
    %v21 = vld [vmem:[%s1 + $0x20] sm:$0xff]
    %v22 = vld [vmem:[%s1 + $0x28] sm:$0xff]
    %v23 = vld [vmem:[%s1 + $0x30] sm:$0xff]
    %v24 = vld [vmem:[%s1 + $0x38] sm:$0xff]
    %v25 = vld [vmem:[%s1 + $0x40] sm:$0xff]
    %v26 = vld [vmem:[%s1 + $0x48] sm:$0xff]
    %v27 = vld [vmem:[%s1 + $0x50] sm:$0xff]
    %v28 = vld [vmem:[%s1 + $0x58] sm:$0xff]
    %v29 = vld [vmem:[%s1 + $0x60] sm:$0xff]
    %v30 = vld [vmem:[%s1 + $0x68] sm:$0xff]
    %v31 = vld [vmem:[%s1 + $0x70] sm:$0xff]
    %v32 = vld [vmem:[%s1 + $0x78] sm:$0xff]
    %v33 = vld [vmem:[%s1 + $0x80] sm:$0xff]
    %v34 = vld [vmem:[%s1 + $0x88] sm:$0xff]
    %v35 = vld [vmem:[%s1 + $0x90] sm:$0xff]
    %v36 = vld [vmem:[%s1 + $0x98] sm:$0xff]
    %v37 = vld [vmem:[%s1 + $0xa0] sm:$0xff]
    %v38 = vld [vmem:[%s1 + $0xa8] sm:$0xff]
    %v39 = vld [vmem:[%s1 + $0xb0] sm:$0xff]
    %v40 = vld [vmem:[%s1 + $0xb8] sm:$0xff]
    %v41 = vld [vmem:[%s1 + $0xc0] sm:$0xff]
    %v42 = vld [vmem:[%s1 + $0xc8] sm:$0xff]
    %v43 = vld [vmem:[%s1 + $0xd0] sm:$0xff]
    %v44 = vld [vmem:[%s1 + $0xd8] sm:$0xff]
    %v45 = vld [vmem:[%s1 + $0xe0] sm:$0xff]
    %v46 = vld [vmem:[%s1 + $0xe8] sm:$0xff]
    %v47 = vld [vmem:[%s1 + $0xf0] sm:$0xff]
    %v48 = vld [vmem:[%s1 + $0xf8] sm:$0xff]
    %v49 = vld [vmem:[%s1 + $0x100] sm:$0xff]
    %v50 = vld [vmem:[%s1 + $0x108] sm:$0xff]
    %v51 = vld [vmem:[%s1 + $0x110] sm:$0xff]
    %v52 = vld [vmem:[%s1 + $0x118] sm:$0xff]
    %v53 = vld [vmem:[%s1 + $0x120] sm:$0xff]
    %v54 = vld [vmem:[%s1 + $0x128] sm:$0xff]
    %v55 = vld [vmem:[%s1 + $0x130] sm:$0xff]
    %v56 = vld [vmem:[%s1 + $0x138] sm:$0xff]
    %v57 = vld [vmem:[%s1 + $0x140] sm:$0xff]
    %v58 = vld [vmem:[%s1 + $0x148] sm:$0xff]
    %v59 = vld [vmem:[%s1 + $0x150] sm:$0xff]
    %v60 = vld [vmem:[%s1 + $0x158] sm:$0xff]
    %v61 = vld [vmem:[%s1 + $0x160] sm:$0xff]
    %v62 = vld [vmem:[%s1 + $0x168] sm:$0xff]
    %v63 = vld [vmem:[%s1 + $0x170] sm:$0xff]
    %v64 = vld [vmem:[%s1 + $0x178] sm:$0xff]
    %v65 = vld [vmem:[%s1 + $0x180] sm:$0xff]
    %v66 = vld [vmem:[%s1 + $0x188] sm:$0xff]
    %v67 = vld [vmem:[%s1 + $0x190] sm:$0xff]
    %v68 = vld [vmem:[%s1 + $0x198] sm:$0xff]
    %v69 = vld [vmem:[%s1 + $0x1a0] sm:$0xff]
    %v70 = vld [vmem:[%s1 + $0x1a8] sm:$0xff]
    %v71 = vld [vmem:[%s1 + $0x1b0] sm:$0xff]
    %v72 = vld [vmem:[%s1 + $0x1b8] sm:$0xff]
    %v73 = vld [vmem:[%s1 + $0x1c0] sm:$0xff]
    %v74 = vld [vmem:[%s1 + $0x1c8] sm:$0xff]
    %v75 = vld [vmem:[%s1 + $0x1d0] sm:$0xff]
    %v76 = vld [vmem:[%s1 + $0x1d8] sm:$0xff]
    %v77 = vld [vmem:[%s1 + $0x1e0] sm:$0xff]
    %v78 = vld [vmem:[%s1 + $0x1e8] sm:$0xff]
    %v79 = vld [vmem:[%s1 + $0x1f0] sm:$0xff]
    %v80 = vld [vmem:[%s1 + $0x1f8] sm:$0xff]
    %v81 = vld [vmem:[%s1 + $0x200] sm:$0xff]
    %v82 = vld [vmem:[%s1 + $0x208] sm:$0xff]
    %v83 = vld [vmem:[%s1 + $0x210] sm:$0xff]
    %v84 = vld [vmem:[%s1 + $0x218] sm:$0xff]
    %v85 = vld [vmem:[%s1 + $0x220] sm:$0xff]
    %v86 = vld [vmem:[%s1 + $0x228] sm:$0xff]
    %v87 = vld [vmem:[%s1 + $0x230] sm:$0xff]
    %v88 = vld [vmem:[%s1 + $0x238] sm:$0xff]
    %v89 = vld [vmem:[%s1 + $0x240] sm:$0xff]
    %v90 = vld [vmem:[%s1 + $0x248] sm:$0xff]
    %v91 = vld [vmem:[%s1 + $0x250] sm:$0xff]
    %v92 = vld [vmem:[%s1 + $0x258] sm:$0xff]
    %v93 = vld [vmem:[%s1 + $0x260] sm:$0xff]
    %v94 = vld [vmem:[%s1 + $0x268] sm:$0xff]
    %v95 = vld [vmem:[%s1 + $0x270] sm:$0xff]
    %v96 = vld [vmem:[%s1 + $0x278] sm:$0xff]
    %v97 = vld [vmem:[%s1 + $0x280] sm:$0xff]
    %v98 = vld [vmem:[%s1 + $0x288] sm:$0xff]
    %v99 = vld [vmem:[%s1 + $0x290] sm:$0xff]
    %v100 = vld [vmem:[%s1 + $0x298] sm:$0xff]
    %v101 = vld [vmem:[%s1 + $0x2a0] sm:$0xff]
    %v102 = vld [vmem:[%s1 + $0x2a8] sm:$0xff]
    %v103 = vld [vmem:[%s1 + $0x2b0] sm:$0xff]
    %v104 = vld [vmem:[%s1 + $0x2b8] sm:$0xff]
    %v105 = vld [vmem:[%s1 + $0x2c0] sm:$0xff]
    %v106 = vld [vmem:[%s1 + $0x2c8] sm:$0xff]
    %v107 = vld [vmem:[%s1 + $0x2d0] sm:$0xff]
    %v108 = vld [vmem:[%s1 + $0x2d8] sm:$0xff]
    %v109 = vld [vmem:[%s1 + $0x2e0] sm:$0xff]
    %v110 = vld [vmem:[%s1 + $0x2e8] sm:$0xff]
    %v111 = vld [vmem:[%s1 + $0x2f0] sm:$0xff]
    %v112 = vld [vmem:[%s1 + $0x2f8] sm:$0xff]
    %v113 = vld [vmem:[%s1 + $0x300] sm:$0xff]
    %v114 = vld [vmem:[%s1 + $0x308] sm:$0xff]
    %v115 = vld [vmem:[%s2] sm:$0x1]
    %v117 = vperm.slane %v115, 0
    %121 = vst [vmem:[#allocation1] ss:$4 sm:$0xff] %v15
    %s122 = scalar_lea.vmem [#allocation1], 32
    %123 = vst [vmem:[%s122] ss:$4 sm:$0xff] %v16
    %v124 = vld.sshfl [vmem:[#allocation1] sm:$0xff pattern:$0x73625140]
    %v125 = vld.sshfl [vmem:[#allocation1 + $0x8] sm:$0xff pattern:$0x73625140]
    %v126 = vld.sshfl [vmem:[#allocation1 + $0x10] sm:$0xff pattern:$0x73625140]
    %v127 = vld.sshfl [vmem:[#allocation1 + $0x18] sm:$0xff pattern:$0x73625140]
    %v128 = vld.sshfl [vmem:[#allocation1 + $0x20] sm:$0xff pattern:$0x73625140]
    %v129 = vld.sshfl [vmem:[#allocation1 + $0x28] sm:$0xff pattern:$0x73625140]
    %v130 = vld.sshfl [vmem:[#allocation1 + $0x30] sm:$0xff pattern:$0x73625140]
    %vm137 = vcmask 130048
    %v138 = vsel %vm137, %v130, 0
    %140 = vmatpush.msra.mxu0 %v32
    %141 = vmatpush.msra.mxu0 %v31
    %142 = vmatpush.msra.mxu0 %v30
    %143 = vmatpush.msra.mxu0 %v29
    %144 = vmatpush.msra.mxu0 %v28
    %145 = vmatpush.msra.mxu0 %v27
    %146 = vmatpush.msra.mxu0 %v26
    %147 = vmatpush.msra.mxu0 %v25
    %148 = vmatpush.msra.mxu0 %v24
    %149 = vmatpush.msra.mxu0 %v23
    %150 = vmatpush.msra.mxu0 %v22
    %151 = vmatpush.msra.mxu0 %v21
    %152 = vmatpush.msra.mxu0 %v20
    %153 = vmatpush.msra.mxu0 %v19
    %154 = vmatpush.msra.mxu0 %v18
    %155 = vmatpush.msra.mxu0 %v17
    %156 = vmatmul.f32.gmra.mxu0 %v124
    %v157 = vpop.f32.mrf.mxu0
    %v158 = vadd.f32 %v117, %v157
    %159 = vdwg.mxu0
    %160 = vmatpush.msra.mxu0 %v48
    %161 = vmatpush.msra.mxu0 %v47
    %162 = vmatpush.msra.mxu0 %v46
    %163 = vmatpush.msra.mxu0 %v45
    %164 = vmatpush.msra.mxu0 %v44
    %165 = vmatpush.msra.mxu0 %v43
    %166 = vmatpush.msra.mxu0 %v42
    %167 = vmatpush.msra.mxu0 %v41
    %168 = vmatpush.msra.mxu0 %v40
    %169 = vmatpush.msra.mxu0 %v39
    %170 = vmatpush.msra.mxu0 %v38
    %171 = vmatpush.msra.mxu0 %v37
    %172 = vmatpush.msra.mxu0 %v36
    %173 = vmatpush.msra.mxu0 %v35
    %174 = vmatpush.msra.mxu0 %v34
    %175 = vmatpush.msra.mxu0 %v33
    %176 = vmatmul.f32.gmra.mxu0 %v125
    %v177 = vpop.f32.mrf.mxu0
    %v178 = vadd.f32 %v158, %v177
    %179 = vdwg.mxu0
    %180 = vmatpush.msra.mxu0 %v64
    %181 = vmatpush.msra.mxu0 %v63
    %182 = vmatpush.msra.mxu0 %v62
    %183 = vmatpush.msra.mxu0 %v61
    %184 = vmatpush.msra.mxu0 %v60
    %185 = vmatpush.msra.mxu0 %v59
    %186 = vmatpush.msra.mxu0 %v58
    %187 = vmatpush.msra.mxu0 %v57
    %188 = vmatpush.msra.mxu0 %v56
    %189 = vmatpush.msra.mxu0 %v55
    %190 = vmatpush.msra.mxu0 %v54
    %191 = vmatpush.msra.mxu0 %v53
    %192 = vmatpush.msra.mxu0 %v52
    %193 = vmatpush.msra.mxu0 %v51
    %194 = vmatpush.msra.mxu0 %v50
    %195 = vmatpush.msra.mxu0 %v49
    %196 = vmatmul.f32.gmra.mxu0 %v126
    %v197 = vpop.f32.mrf.mxu0
    %v198 = vadd.f32 %v178, %v197
    %199 = vdwg.mxu0
    %200 = vmatpush.msra.mxu0 %v80
    %201 = vmatpush.msra.mxu0 %v79
    %202 = vmatpush.msra.mxu0 %v78
    %203 = vmatpush.msra.mxu0 %v77
    %204 = vmatpush.msra.mxu0 %v76
    %205 = vmatpush.msra.mxu0 %v75
    %206 = vmatpush.msra.mxu0 %v74
    %207 = vmatpush.msra.mxu0 %v73
    %208 = vmatpush.msra.mxu0 %v72
    %209 = vmatpush.msra.mxu0 %v71
    %210 = vmatpush.msra.mxu0 %v70
    %211 = vmatpush.msra.mxu0 %v69
    %212 = vmatpush.msra.mxu0 %v68
    %213 = vmatpush.msra.mxu0 %v67
    %214 = vmatpush.msra.mxu0 %v66
    %215 = vmatpush.msra.mxu0 %v65
    %216 = vmatmul.f32.gmra.mxu0 %v127
    %v217 = vpop.f32.mrf.mxu0
    %v218 = vadd.f32 %v198, %v217
    %219 = vdwg.mxu0
    %220 = vmatpush.msra.mxu0 %v96
    %221 = vmatpush.msra.mxu0 %v95
    %222 = vmatpush.msra.mxu0 %v94
    %223 = vmatpush.msra.mxu0 %v93
    %224 = vmatpush.msra.mxu0 %v92
    %225 = vmatpush.msra.mxu0 %v91
    %226 = vmatpush.msra.mxu0 %v90
    %227 = vmatpush.msra.mxu0 %v89
    %228 = vmatpush.msra.mxu0 %v88
    %229 = vmatpush.msra.mxu0 %v87
    %230 = vmatpush.msra.mxu0 %v86
    %231 = vmatpush.msra.mxu0 %v85
    %232 = vmatpush.msra.mxu0 %v84
    %233 = vmatpush.msra.mxu0 %v83
    %234 = vmatpush.msra.mxu0 %v82
    %235 = vmatpush.msra.mxu0 %v81
    %236 = vmatmul.f32.gmra.mxu0 %v128
    %v237 = vpop.f32.mrf.mxu0
    %v238 = vadd.f32 %v218, %v237
    %239 = vdwg.mxu0
    %240 = vmatpush.msra.mxu0 %v112
    %241 = vmatpush.msra.mxu0 %v111
    %242 = vmatpush.msra.mxu0 %v110
    %243 = vmatpush.msra.mxu0 %v109
    %244 = vmatpush.msra.mxu0 %v108
    %245 = vmatpush.msra.mxu0 %v107
    %246 = vmatpush.msra.mxu0 %v106
    %247 = vmatpush.msra.mxu0 %v105
    %248 = vmatpush.msra.mxu0 %v104
    %249 = vmatpush.msra.mxu0 %v103
    %250 = vmatpush.msra.mxu0 %v102
    %251 = vmatpush.msra.mxu0 %v101
    %252 = vmatpush.msra.mxu0 %v100
    %253 = vmatpush.msra.mxu0 %v99
    %254 = vmatpush.msra.mxu0 %v98
    %255 = vmatpush.msra.mxu0 %v97
    %256 = vmatmul.f32.gmra.mxu0 %v129
    %v257 = vpop.f32.mrf.mxu0
    %v258 = vadd.f32 %v238, %v257
    %259 = vdwg.mxu0
    %260 = vmatpush.msra.mxu0 0.0
    %261 = vmatpush.msra.mxu0 0.0
    %262 = vmatpush.msra.mxu0 0.0
    %263 = vmatpush.msra.mxu0 0.0
    %264 = vmatpush.msra.mxu0 0.0
    %265 = vmatpush.msra.mxu0 0.0
    %266 = vmatpush.msra.mxu0 0.0
    %267 = vmatpush.msra.mxu0 0.0
    %268 = vmatpush.msra.mxu0 0.0
    %269 = vmatpush.msra.mxu0 0.0
    %270 = vmatpush.msra.mxu0 0.0
    %271 = vmatpush.msra.mxu0 0.0
    %272 = vmatpush.msra.mxu0 0.0
    %273 = vmatpush.msra.mxu0 0.0
    %274 = vmatpush.msra.mxu0 %v114
    %275 = vmatpush.msra.mxu0 %v113
    %276 = vmatmul.f32.gmra.mxu0 %v138
    %v277 = vpop.f32.mrf.mxu0
    %v278 = vadd.f32 %v258, %v277
    %279 = vdwg.mxu0
    %vm280 = vcmask 74752
    %281 = vst.msk [vmem:[#allocation2] sm:$0x3] %vm280, %v278
    // Predicated region
    $region14: #{svm_forward.1} parent=1 // pred_check
      _
    $region15: #{svm_forward.1} parent=1 // pred_check_branch
      %283 = sbr.rel (0) target = $region17
    $region16: #{svm_forward.1} parent=1 // pred_region
      %285 = vsyncadd [#allocation3], 0
      %s287 = sshll.u32 [#allocation2], 4
      %s288 = int_to_ptr.vmem [resolvable:$true] %s287
      %s289 = sshll.u32 %s3, 4
      %s290 = int_to_ptr.hbm [resolvable:$true] %s289
      %292 = dma.vmem_to_hbm [thread:$0]  %s288, 32, %s290, [#allocation3]
    $region17: #{svm_forward.1} parent=1 // pred_fallthru
      _
    // Predicated region
    $region18: #{svm_forward.1} parent=1 // pred_check
      _
    $region19: #{svm_forward.1} parent=1 // pred_check_branch
      %294 = sbr.rel (0) target = $region21
    $region20: #{svm_forward.1} parent=1 // pred_region
      %296 = dma.done [#allocation3], 32
    $region21: #{svm_forward.1} parent=1 // pred_fallthru
      _
    %297 = vsyncpa [#allocation3], 1

</llo_original>
